<compile_context>
chip_gen: v5e
topology: v5e:2x2
jax: 0.10.0
libtpu: 0.0.40
codegen_flags: <defaults>
</compile_context>

<pallas_src>
import jax
import jax.numpy as jnp
from jax.experimental import pallas as pl
from jax.experimental.pallas import tpu as pltpu


def pruning_ca_kernel(x_ref, w1_ref, w2_ref, o_ref):
    # x_ref : (1, f, c, hw)   one batch element (contiguously reshaped input)
    # w1_ref: (hidden, c)     first  1x1x1 conv weight (PyTorch layout, squeezed)
    # w2_ref: (c, hidden)     second 1x1x1 conv weight
    # o_ref : (1, f, c, hw)   relu(gate * x)
    f = x_ref.shape[1]
    hw = x_ref.shape[3]
    inv_n = 1.0 / (f * hw)

    # ---- pooling: reduce over f first (plain VPU adds/maxes), slab-by-slab ----
    slab0 = x_ref[0, 0]                                        # (c, hw), native dtype

    def pool_body(t, carry):
        s_acc, m_acc = carry
        slab = x_ref[0, t]                                     # (c, hw)
        return (s_acc + slab.astype(jnp.float32), jnp.maximum(m_acc, slab))

    s_f, m_f = jax.lax.fori_loop(
        1, f, pool_body, (slab0.astype(jnp.float32), slab0), unroll=True)

    # ---- one cross-lane (XLU) reduce over hw ----------------------------------
    avg = jnp.sum(s_f, axis=-1, keepdims=True) * inv_n          # (c, 1) f32
    mx = jnp.max(m_f.astype(jnp.float32), axis=-1, keepdims=True)   # (c, 1) f32
    p = jnp.concatenate([avg, mx], axis=-1)                     # (c, 2) f32, in vregs

    # ---- shared MLP, c kept on the sublane axis (no transposes) ---------------
    w1 = w1_ref[...]                                            # (hidden, c)
    w2 = w2_ref[...]                                            # (c, hidden)
    hid = jnp.maximum(
        jnp.dot(w1, p.astype(w1.dtype), preferred_element_type=jnp.float32),
        0.0)                                                    # (hidden, 2) f32
    mlp = jnp.dot(w2, hid.astype(w2.dtype),
                  preferred_element_type=jnp.float32)           # (c, 2) f32
    gate = jax.nn.sigmoid(mlp[:, 0:1] + mlp[:, 1:2])            # (c, 1) f32

    # ---- fused application: out = relu(gate * x), slab-by-slab ----------------
    def apply_body(t, carry):
        slab = x_ref[0, t].astype(jnp.float32)                  # (c, hw)
        o_ref[0, t] = jnp.maximum(slab * gate, 0.0).astype(o_ref.dtype)
        return carry

    jax.lax.fori_loop(0, f, apply_body, 0, unroll=True)


def pruning_cell_ca(x, w1, w2):
    """x: [b, f, c, h, w]; w1: [c//ratio, c]; w2: [c, c//ratio].

    Returns relu(ChannelAttention(x) * x) with shape [b, f, c, h, w].
    """
    b, f, c, h, w = x.shape
    hidden = w1.shape[0]
    hw = h * w

    # Free contiguous reshape (merges trailing dims) -- NO transpose/copy of x.
    x_flat = x.reshape(b, f, c, hw)

    out = pl.pallas_call(
        pruning_ca_kernel,
        out_shape=jax.ShapeDtypeStruct((b, f, c, hw), x.dtype),
        grid=(b,),
        in_specs=[
            pl.BlockSpec((1, f, c, hw), lambda i: (i, 0, 0, 0)),
            pl.BlockSpec((hidden, c), lambda i: (0, 0)),
            pl.BlockSpec((c, hidden), lambda i: (0, 0)),
        ],
        out_specs=pl.BlockSpec((1, f, c, hw), lambda i: (i, 0, 0, 0)),
        compiler_params=pltpu.CompilerParams(
            dimension_semantics=("parallel",)),
    )(x_flat, w1, w2)

    return out.reshape(b, f, c, h, w)


def _reference(x, w1, w2):
    b, f, c, h, w = x.shape
    xt = jnp.transpose(x, (0, 2, 1, 3, 4)).reshape(b, c, -1)
    avg_p = jnp.mean(xt, axis=-1)
    max_p = jnp.max(xt, axis=-1)

    def mlp(p):
        return jnp.maximum(p @ w1.T, 0.0) @ w2.T

    gate = jax.nn.sigmoid(mlp(avg_p) + mlp(max_p))               # (b, c)
    return jnp.maximum(gate[:, None, :, None, None] * x, 0.0)


if __name__ == "__main__":
    key = jax.random.PRNGKey(0)
    k_x, k_w1, k_w2 = jax.random.split(key, 3)

    # in_planes = c = 20, ratio = 5 -> hidden = 4
    b, f, c, h, w = 2, 4, 20, 16, 16
    ratio = 5
    hidden = c // ratio

    x = jax.random.normal(k_x, (b, f, c, h, w), dtype=jnp.float32)
    # Conv3d weights with 1x1x1 kernels, squeezed to 2D matmul weights.
    w1 = jax.random.normal(k_w1, (hidden, c), dtype=jnp.float32) * 0.1
    w2 = jax.random.normal(k_w2, (c, hidden), dtype=jnp.float32) * 0.1

    out = jax.block_until_ready(pruning_cell_ca(x, w1, w2))

    ref = _reference(x, w1, w2)
    assert out.shape == (b, f, c, h, w)
    assert jnp.allclose(out, ref, atol=1e-5, rtol=1e-5)

    print("KERNEL_OK")
</pallas_src>

<mosaic_0001>
module attributes {stable_mosaic.version = 11 : i64} {
  func.func @pruning_ca_kernel(%arg0: i32, %arg1: memref<1x4x20x256xf32, #tpu.memory_space<vmem>>, %arg2: memref<4x20xf32, #tpu.memory_space<vmem>>, %arg3: memref<20x4xf32, #tpu.memory_space<vmem>>, %arg4: memref<1x4x20x256xf32, #tpu.memory_space<vmem>>) attributes {dimension_semantics = [#tpu.dimension_semantics<parallel>], iteration_bounds = array<i64: 2>, scalar_prefetch = 0 : i64, scratch_operands = 0 : i64, tpu.core_type = #tpu.core_type<tc>, window_params = [{transform_indices = @transform_0, window_bounds = array<i64: 1, 4, 20, 256>}, {pipeline_mode = #tpu.pipeline_mode<synchronous>, transform_indices = @transform_1, window_bounds = array<i64: 4, 20>}, {pipeline_mode = #tpu.pipeline_mode<synchronous>, transform_indices = @transform_2, window_bounds = array<i64: 20, 4>}, {transform_indices = @transform_3, window_bounds = array<i64: 1, 4, 20, 256>}]} {
    %c0 = arith.constant 0 : index
    %c0_0 = arith.constant 0 : index
    %c0_1 = arith.constant 0 : index
    %c0_2 = arith.constant 0 : index
    %0 = vector.load %arg1[%c0, %c0_0, %c0_1, %c0_2] : memref<1x4x20x256xf32, #tpu.memory_space<vmem>>, vector<1x1x20x256xf32>
    %1 = vector.shape_cast %0 : vector<1x1x20x256xf32> to vector<20x256xf32>
    %c1_i32 = arith.constant 1 : i32
    %c0_3 = arith.constant 0 : index
    %2 = arith.index_cast %c1_i32 : i32 to index
    %c0_4 = arith.constant 0 : index
    %c0_5 = arith.constant 0 : index
    %3 = vector.load %arg1[%c0_3, %2, %c0_4, %c0_5] : memref<1x4x20x256xf32, #tpu.memory_space<vmem>>, vector<1x1x20x256xf32>
    %4 = vector.shape_cast %3 : vector<1x1x20x256xf32> to vector<20x256xf32>
    %5 = arith.addf %1, %4 : vector<20x256xf32>
    %6 = arith.maximumf %1, %4 : vector<20x256xf32>
    %c2_i32 = arith.constant 2 : i32
    %c0_6 = arith.constant 0 : index
    %7 = arith.index_cast %c2_i32 : i32 to index
    %c0_7 = arith.constant 0 : index
    %c0_8 = arith.constant 0 : index
    %8 = vector.load %arg1[%c0_6, %7, %c0_7, %c0_8] : memref<1x4x20x256xf32, #tpu.memory_space<vmem>>, vector<1x1x20x256xf32>
    %9 = vector.shape_cast %8 : vector<1x1x20x256xf32> to vector<20x256xf32>
    %10 = arith.addf %5, %9 : vector<20x256xf32>
    %11 = arith.maximumf %6, %9 : vector<20x256xf32>
    %c3_i32 = arith.constant 3 : i32
    %c0_9 = arith.constant 0 : index
    %12 = arith.index_cast %c3_i32 : i32 to index
    %c0_10 = arith.constant 0 : index
    %c0_11 = arith.constant 0 : index
    %13 = vector.load %arg1[%c0_9, %12, %c0_10, %c0_11] : memref<1x4x20x256xf32, #tpu.memory_space<vmem>>, vector<1x1x20x256xf32>
    %14 = vector.shape_cast %13 : vector<1x1x20x256xf32> to vector<20x256xf32>
    %15 = arith.addf %10, %14 : vector<20x256xf32>
    %16 = arith.maximumf %11, %14 : vector<20x256xf32>
    %c3_i32_12 = arith.constant 3 : i32
    %cst = arith.constant dense<0.000000e+00> : vector<20xf32>
    %17 = vector.multi_reduction <add>, %15, %cst [1] : vector<20x256xf32> to vector<20xf32>
    %18 = vector.shape_cast %17 : vector<20xf32> to vector<20x1xf32>
    %cst_13 = arith.constant 9.765625E-4 : f32
    %19 = vector.broadcast %cst_13 : f32 to vector<20x1xf32>
    %20 = arith.mulf %18, %19 : vector<20x1xf32>
    %cst_14 = arith.constant dense<0xFF800000> : vector<20xf32>
    %21 = vector.multi_reduction <maximumf>, %16, %cst_14 [1] : vector<20x256xf32> to vector<20xf32>
    %22 = vector.shape_cast %21 : vector<20xf32> to vector<20x1xf32>
    %23 = tpu.concatenate %20, %22 in 1 : vector<20x1xf32>, vector<20x1xf32> -> vector<20x2xf32>
    %c0_15 = arith.constant 0 : index
    %c0_16 = arith.constant 0 : index
    %24 = vector.load %arg2[%c0_15, %c0_16] : memref<4x20xf32, #tpu.memory_space<vmem>>, vector<4x20xf32>
    %c0_17 = arith.constant 0 : index
    %c0_18 = arith.constant 0 : index
    %25 = vector.load %arg3[%c0_17, %c0_18] : memref<20x4xf32, #tpu.memory_space<vmem>>, vector<20x4xf32>
    %cst_19 = arith.constant dense<0.000000e+00> : vector<4x2xf32>
    %26 = tpu.matmul %24, %23, %cst_19 {dimension_numbers = #tpu.dot_dimension_numbers<[1], [0], [0], [1], [0, 0, 1, 1], [], []>} : vector<4x20xf32>, vector<20x2xf32>, vector<4x2xf32> -> vector<4x2xf32>
    %cst_20 = arith.constant 0.000000e+00 : f32
    %27 = vector.broadcast %cst_20 : f32 to vector<4x2xf32>
    %28 = arith.maximumf %26, %27 : vector<4x2xf32>
    %cst_21 = arith.constant dense<0.000000e+00> : vector<20x2xf32>
    %29 = tpu.matmul %25, %28, %cst_21 {dimension_numbers = #tpu.dot_dimension_numbers<[1], [0], [0], [1], [0, 0, 1, 1], [], []>} : vector<20x4xf32>, vector<4x2xf32>, vector<20x2xf32> -> vector<20x2xf32>
    %30 = vector.extract_strided_slice %29 {offsets = [0, 0], sizes = [20, 1], strides = [1, 1]} : vector<20x2xf32> to vector<20x1xf32>
    %31 = vector.extract_strided_slice %29 {offsets = [0, 1], sizes = [20, 1], strides = [1, 1]} : vector<20x2xf32> to vector<20x1xf32>
    %32 = arith.addf %30, %31 : vector<20x1xf32>
    %33 = arith.negf %32 : vector<20x1xf32>
    %34 = math.exp %33 : vector<20x1xf32>
    %cst_22 = arith.constant 1.000000e+00 : f32
    %35 = vector.broadcast %cst_22 : f32 to vector<20x1xf32>
    %36 = arith.addf %35, %34 : vector<20x1xf32>
    %37 = arith.divf %35, %36 : vector<20x1xf32>
    %c0_i32 = arith.constant 0 : i32
    %c0_23 = arith.constant 0 : index
    %38 = arith.index_cast %c0_i32 : i32 to index
    %c0_24 = arith.constant 0 : index
    %c0_25 = arith.constant 0 : index
    %39 = vector.load %arg1[%c0_23, %38, %c0_24, %c0_25] : memref<1x4x20x256xf32, #tpu.memory_space<vmem>>, vector<1x1x20x256xf32>
    %40 = vector.shape_cast %39 : vector<1x1x20x256xf32> to vector<20x256xf32>
    %41 = vector.broadcast %37 : vector<20x1xf32> to vector<20x256xf32>
    %42 = arith.mulf %40, %41 : vector<20x256xf32>
    %cst_26 = arith.constant 0.000000e+00 : f32
    %43 = vector.broadcast %cst_26 : f32 to vector<20x256xf32>
    %44 = arith.maximumf %42, %43 : vector<20x256xf32>
    %c0_27 = arith.constant 0 : index
    %45 = arith.index_cast %c0_i32 : i32 to index
    %c0_28 = arith.constant 0 : index
    %c0_29 = arith.constant 0 : index
    %46 = vector.load %arg4[%c0_27, %45, %c0_28, %c0_29] : memref<1x4x20x256xf32, #tpu.memory_space<vmem>>, vector<1x1x20x256xf32>
    %47 = vector.shape_cast %46 : vector<1x1x20x256xf32> to vector<20x256xf32>
    %48 = vector.shape_cast %44 : vector<20x256xf32> to vector<1x1x20x256xf32>
    tpu.vector_store %arg4[%c0_27, %45, %c0_28, %c0_29], %48 {strides = array<i32>} : memref<1x4x20x256xf32, #tpu.memory_space<vmem>>, vector<1x1x20x256xf32>,
    %c1_i32_30 = arith.constant 1 : i32
    %c0_31 = arith.constant 0 : index
    %49 = arith.index_cast %c1_i32_30 : i32 to index
    %c0_32 = arith.constant 0 : index
    %c0_33 = arith.constant 0 : index
    %50 = vector.load %arg1[%c0_31, %49, %c0_32, %c0_33] : memref<1x4x20x256xf32, #tpu.memory_space<vmem>>, vector<1x1x20x256xf32>
    %51 = vector.shape_cast %50 : vector<1x1x20x256xf32> to vector<20x256xf32>
    %52 = vector.broadcast %37 : vector<20x1xf32> to vector<20x256xf32>
    %53 = arith.mulf %51, %52 : vector<20x256xf32>
    %cst_34 = arith.constant 0.000000e+00 : f32
    %54 = vector.broadcast %cst_34 : f32 to vector<20x256xf32>
    %55 = arith.maximumf %53, %54 : vector<20x256xf32>
    %c0_35 = arith.constant 0 : index
    %56 = arith.index_cast %c1_i32_30 : i32 to index
    %c0_36 = arith.constant 0 : index
    %c0_37 = arith.constant 0 : index
    %57 = vector.load %arg4[%c0_35, %56, %c0_36, %c0_37] : memref<1x4x20x256xf32, #tpu.memory_space<vmem>>, vector<1x1x20x256xf32>
    %58 = vector.shape_cast %57 : vector<1x1x20x256xf32> to vector<20x256xf32>
    %59 = vector.shape_cast %55 : vector<20x256xf32> to vector<1x1x20x256xf32>
    tpu.vector_store %arg4[%c0_35, %56, %c0_36, %c0_37], %59 {strides = array<i32>} : memref<1x4x20x256xf32, #tpu.memory_space<vmem>>, vector<1x1x20x256xf32>,
    %c2_i32_38 = arith.constant 2 : i32
    %c0_39 = arith.constant 0 : index
    %60 = arith.index_cast %c2_i32_38 : i32 to index
    %c0_40 = arith.constant 0 : index
    %c0_41 = arith.constant 0 : index
    %61 = vector.load %arg1[%c0_39, %60, %c0_40, %c0_41] : memref<1x4x20x256xf32, #tpu.memory_space<vmem>>, vector<1x1x20x256xf32>
    %62 = vector.shape_cast %61 : vector<1x1x20x256xf32> to vector<20x256xf32>
    %63 = vector.broadcast %37 : vector<20x1xf32> to vector<20x256xf32>
    %64 = arith.mulf %62, %63 : vector<20x256xf32>
    %cst_42 = arith.constant 0.000000e+00 : f32
    %65 = vector.broadcast %cst_42 : f32 to vector<20x256xf32>
    %66 = arith.maximumf %64, %65 : vector<20x256xf32>
    %c0_43 = arith.constant 0 : index
    %67 = arith.index_cast %c2_i32_38 : i32 to index
    %c0_44 = arith.constant 0 : index
    %c0_45 = arith.constant 0 : index
    %68 = vector.load %arg4[%c0_43, %67, %c0_44, %c0_45] : memref<1x4x20x256xf32, #tpu.memory_space<vmem>>, vector<1x1x20x256xf32>
    %69 = vector.shape_cast %68 : vector<1x1x20x256xf32> to vector<20x256xf32>
    %70 = vector.shape_cast %66 : vector<20x256xf32> to vector<1x1x20x256xf32>
    tpu.vector_store %arg4[%c0_43, %67, %c0_44, %c0_45], %70 {strides = array<i32>} : memref<1x4x20x256xf32, #tpu.memory_space<vmem>>, vector<1x1x20x256xf32>,
    %c3_i32_46 = arith.constant 3 : i32
    %c0_47 = arith.constant 0 : index
    %71 = arith.index_cast %c3_i32_46 : i32 to index
    %c0_48 = arith.constant 0 : index
    %c0_49 = arith.constant 0 : index
    %72 = vector.load %arg1[%c0_47, %71, %c0_48, %c0_49] : memref<1x4x20x256xf32, #tpu.memory_space<vmem>>, vector<1x1x20x256xf32>
    %73 = vector.shape_cast %72 : vector<1x1x20x256xf32> to vector<20x256xf32>
    %74 = vector.broadcast %37 : vector<20x1xf32> to vector<20x256xf32>
    %75 = arith.mulf %73, %74 : vector<20x256xf32>
    %cst_50 = arith.constant 0.000000e+00 : f32
    %76 = vector.broadcast %cst_50 : f32 to vector<20x256xf32>
    %77 = arith.maximumf %75, %76 : vector<20x256xf32>
    %c0_51 = arith.constant 0 : index
    %78 = arith.index_cast %c3_i32_46 : i32 to index
    %c0_52 = arith.constant 0 : index
    %c0_53 = arith.constant 0 : index
    %79 = vector.load %arg4[%c0_51, %78, %c0_52, %c0_53] : memref<1x4x20x256xf32, #tpu.memory_space<vmem>>, vector<1x1x20x256xf32>
    %80 = vector.shape_cast %79 : vector<1x1x20x256xf32> to vector<20x256xf32>
    %81 = vector.shape_cast %77 : vector<20x256xf32> to vector<1x1x20x256xf32>
    tpu.vector_store %arg4[%c0_51, %78, %c0_52, %c0_53], %81 {strides = array<i32>} : memref<1x4x20x256xf32, #tpu.memory_space<vmem>>, vector<1x1x20x256xf32>,
    %c4_i32 = arith.constant 4 : i32
    return
  }
  func.func @transform_0(%arg0: i32) -> (i32, i32, i32, i32) {
    %c0_i32 = arith.constant 0 : i32
    %c0_i32_0 = arith.constant 0 : i32
    %c0_i32_1 = arith.constant 0 : i32
    %c0_i32_2 = arith.constant 0 : i32
    return %arg0, %c0_i32, %c0_i32_0, %c0_i32_1 : i32, i32, i32, i32
  }
  func.func @transform_1(%arg0: i32) -> (i32, i32) {
    %c0_i32 = arith.constant 0 : i32
    %c0_i32_0 = arith.constant 0 : i32
    %c0_i32_1 = arith.constant 0 : i32
    return %c0_i32, %c0_i32_0 : i32, i32
  }
  func.func @transform_2(%arg0: i32) -> (i32, i32) {
    %c0_i32 = arith.constant 0 : i32
    %c0_i32_0 = arith.constant 0 : i32
    %c0_i32_1 = arith.constant 0 : i32
    return %c0_i32, %c0_i32_0 : i32, i32
  }
  func.func @transform_3(%arg0: i32) -> (i32, i32, i32, i32) {
    %c0_i32 = arith.constant 0 : i32
    %c0_i32_0 = arith.constant 0 : i32
    %c0_i32_1 = arith.constant 0 : i32
    %c0_i32_2 = arith.constant 0 : i32
    return %arg0, %c0_i32, %c0_i32_0, %c0_i32_1 : i32, i32, i32, i32
  }
}

</mosaic_0001>

<llo_original>
// kernel: tpu_custom_call.1
$region0: #{tpu_custom_call.1}
  #allocation0 [shape = 'u32[]', space=smem, size = 0x4, offset = 0x4, fixed_abs, tag = 'smem constant byte address 0x4 - core index']
  #allocation1 [shape = 'u32[72,128]{1,0:T(1,128)}', space=vmem, size = 0x9000, scoped, tag = 'internal scratch']
  %s0 = inlined_call_operand.vmem [shape: f32[2,4,20,256], index: 0, kind: input, shape index: {}]
  %s1 = inlined_call_operand.vmem [shape: f32[4,20], index: 1, kind: input, shape index: {}]
  %s2 = inlined_call_operand.vmem [shape: f32[20,4], index: 2, kind: input, shape index: {}]
  %s3 = inlined_call_operand.vmem [shape: f32[2,4,20,256], index: 3, kind: output, shape index: {}]
  %s4 = sld [smem:[#allocation0]]
  $region45: #{tpu_custom_call.1} parent=0
    _
  %s6 = ssub.s32 1, %s4
  %s7 = scalar_select 0, %s6, %s4
  loop: start=0, step=1, limit=4
  $region2: #{tpu_custom_call.1} parent=0 // loop_pre_header
    _
  $region3: #{tpu_custom_call.1} parent=0 // loop_header
    %s9 = sphi 0, %s13
    %p10 = scmp.ge.s32.totalorder %s9, 4
    %s19 = sphi 0, %s21
    %s22 = sphi 0, %s19
    %s23 = sphi 0, %s22
    %s39 = sphi 0, %s23
    %s43 = sphi 0, %s43
    %s45 = sphi 0, %s43
    %s46 = sphi 0, %s45
    %s60 = sphi 0, %s46
    %s64 = sphi 0, %s64
    %s66 = sphi 0, %s64
    %s67 = sphi 0, %s66
    %s81 = sphi 0, %s67
    %s87 = sphi 0, %s89
    %s90 = sphi 0, %s87
    %s91 = sphi 0, %s90
    %s107 = sphi 0, %s91
  $region4: #{tpu_custom_call.1} parent=0 // loop_header_branch
    %12 = sbr.rel (%p10) target = $region8
  $region5: #{tpu_custom_call.1} parent=0 // loop_body
    %s14 = ssub.s32 %s9, 1
    %s15 = ssub.s32 %s9, 2
    %s16 = sadd.s32 %s9, 1
    %s17 = ssub.s32 %s9, %s16
    %p18 = scmp.eq.s32.totalorder %s17, 0
    %s20 = sadd.s32 %s19, 1
    %s21 = scalar_select %p18, %s19, %s20
    %p24 = pneg %p18
    %p25 = scmp.eq.s32.totalorder %s9, 1
    %p26 = por %p24, %p25
    %p27 = scmp.ne.s32.totalorder %s19, %s22
    %p28 = scmp.eq.s32.totalorder %s9, 0
    %p29 = por %p27, %p28
    %p30 = scmp.ne.s32.totalorder %s19, %s22
    %p31 = scmp.eq.s32.totalorder %s14, 1
    %p32 = por %p30, %p31
    %p33 = scmp.ne.s32.totalorder %s22, %s23
    %p34 = scmp.eq.s32.totalorder %s14, 0
    %p35 = por %p33, %p34
    %p36 = scmp.ne.s32.totalorder %s22, %s23
    %p37 = scmp.eq.s32.totalorder %s15, 1
    %p38 = por %p36, %p37
    %p40 = scmp.ne.s32.totalorder %s23, %s39
    %p41 = scmp.eq.s32.totalorder %s15, 0
    %p42 = por %p40, %p41
    %s44 = sadd.s32 %s43, 1
    %p47 = scmp.eq.s32.totalorder %s9, 1
    %p48 = scmp.ne.s32.totalorder %s43, %s45
    %p49 = scmp.eq.s32.totalorder %s9, 0
    %p50 = por %p48, %p49
    %p51 = scmp.ne.s32.totalorder %s43, %s45
    %p52 = scmp.eq.s32.totalorder %s14, 1
    %p53 = por %p51, %p52
    %p54 = scmp.ne.s32.totalorder %s45, %s46
    %p55 = scmp.eq.s32.totalorder %s14, 0
    %p56 = por %p54, %p55
    %p57 = scmp.ne.s32.totalorder %s45, %s46
    %p58 = scmp.eq.s32.totalorder %s15, 1
    %p59 = por %p57, %p58
    %p61 = scmp.ne.s32.totalorder %s46, %s60
    %p62 = scmp.eq.s32.totalorder %s15, 0
    %p63 = por %p61, %p62
    %s65 = sadd.s32 %s64, 1
    %p68 = scmp.eq.s32.totalorder %s9, 1
    %p69 = scmp.ne.s32.totalorder %s64, %s66
    %p70 = scmp.eq.s32.totalorder %s9, 0
    %p71 = por %p69, %p70
    %p72 = scmp.ne.s32.totalorder %s64, %s66
    %p73 = scmp.eq.s32.totalorder %s14, 1
    %p74 = por %p72, %p73
    %p75 = scmp.ne.s32.totalorder %s66, %s67
    %p76 = scmp.eq.s32.totalorder %s14, 0
    %p77 = por %p75, %p76
    %p78 = scmp.ne.s32.totalorder %s66, %s67
    %p79 = scmp.eq.s32.totalorder %s15, 1
    %p80 = por %p78, %p79
    %p82 = scmp.ne.s32.totalorder %s67, %s81
    %p83 = scmp.eq.s32.totalorder %s15, 0
    %p84 = por %p82, %p83
    %s85 = ssub.s32 %s9, %s16
    %p86 = scmp.eq.s32.totalorder %s85, 0
    %s88 = sadd.s32 %s87, 1
    %s89 = scalar_select %p86, %s87, %s88
    %p92 = pneg %p86
    %p93 = scmp.eq.s32.totalorder %s9, 1
    %p94 = por %p92, %p93
    %p95 = scmp.ne.s32.totalorder %s87, %s90
    %p96 = scmp.eq.s32.totalorder %s9, 0
    %p97 = por %p95, %p96
    %p98 = scmp.ne.s32.totalorder %s87, %s90
    %p99 = scmp.eq.s32.totalorder %s14, 1
    %p100 = por %p98, %p99
    %p101 = scmp.ne.s32.totalorder %s90, %s91
    %p102 = scmp.eq.s32.totalorder %s14, 0
    %p103 = por %p101, %p102
    %p104 = scmp.ne.s32.totalorder %s90, %s91
    %p105 = scmp.eq.s32.totalorder %s15, 1
    %p106 = por %p104, %p105
    %p108 = scmp.ne.s32.totalorder %s91, %s107
    %p109 = scmp.eq.s32.totalorder %s15, 0
    %p110 = por %p108, %p109
    %p111 = scmp.le.s32.totalorder 1, %s9
    %p112 = scmp.lt.s32.totalorder %s9, 3
    %p113 = pnand %p111, %p112
    %p114 = pneg %p113
    // Predicated region
    $region9: #{tpu_custom_call.1} parent=5 // pred_check
      _
    $region10: #{tpu_custom_call.1} parent=5 // pred_check_branch
      %116 = sbr.rel (%p113) target = $region12
    $region11: #{tpu_custom_call.1} parent=5 // pred_region
      %s117 = ssub.s32 %s9, 1
      // Predicated region
      $region13: #{tpu_custom_call.1} parent=11 // pred_check
        %p118 = pneg %p56
      $region14: #{tpu_custom_call.1} parent=11 // pred_check_branch
        %120 = sbr.rel (%p118) target = $region16
      $region15: #{tpu_custom_call.1} parent=11 // pred_region
        _
      $region16: #{tpu_custom_call.1} parent=11 // pred_fallthru
        _
      // Predicated region
      $region17: #{tpu_custom_call.1} parent=11 // pred_check
        %p121 = pneg %p77
      $region18: #{tpu_custom_call.1} parent=11 // pred_check_branch
        %123 = sbr.rel (%p121) target = $region20
      $region19: #{tpu_custom_call.1} parent=11 // pred_region
        _
      $region20: #{tpu_custom_call.1} parent=11 // pred_fallthru
        _
    $region12: #{tpu_custom_call.1} parent=5 // pred_fallthru
      _
    %p124 = scmp.lt.s32.totalorder %s9, 2
    // Predicated region
    $region21: #{tpu_custom_call.1} parent=5 // pred_check
      %p125 = pneg %p124
    $region22: #{tpu_custom_call.1} parent=5 // pred_check_branch
      %127 = sbr.rel (%p125) target = $region24
    $region23: #{tpu_custom_call.1} parent=5 // pred_region
      // Predicated region
      $region25: #{tpu_custom_call.1} parent=23 // pred_check
        %p128 = pneg %p29
      $region26: #{tpu_custom_call.1} parent=23 // pred_check_branch
        %130 = sbr.rel (%p128) target = $region28
      $region27: #{tpu_custom_call.1} parent=23 // pred_region
        %p131 = scmp.lt.s32.totalorder %s9, 1
        %s132 = scalar_select %p131, %s9, 1
        %s133 = smul.addr %s132, 24
        %s134 = smul.addr %s133, 8
        %s135 = scalar_lea.vmem %s0, %s134
      $region28: #{tpu_custom_call.1} parent=23 // pred_fallthru
        _
    $region24: #{tpu_custom_call.1} parent=5 // pred_fallthru
      _
    %p136 = scmp.le.s32.totalorder 1, %s9
    %p137 = scmp.lt.s32.totalorder %s9, 3
    %p138 = pnand %p136, %p137
    %p139 = pneg %p138
    // Predicated region
    $region29: #{tpu_custom_call.1} parent=5 // pred_check
      _
    $region30: #{tpu_custom_call.1} parent=5 // pred_check_branch
      %141 = sbr.rel (%p138) target = $region32
    $region31: #{tpu_custom_call.1} parent=5 // pred_region
      %s142 = ssub.s32 %s9, 1
      %p143 = scmp.lt.s32.totalorder %s14, 1
      %s144 = scalar_select %p143, %s14, 1
      %s145 = smul.addr %s144, 24
      %s146 = smul.addr %s145, 8
      %s147 = scalar_lea.vmem %s0, %s146
      %p148 = pneg %p35
      %p149 = pneg %p32
      %p150 = pneg %p56
      %p151 = pneg %p53
      %p152 = pneg %p77
      %p153 = pneg %p74
      %p154 = pneg %p103
      %p155 = pneg %p100
      %p156 = scmp.lt.s32.totalorder %s14, 1
      %s157 = scalar_select %p156, %s14, 1
      %s158 = smul.addr %s157, 24
      %s159 = smul.addr %s158, 8
      %s160 = scalar_lea.vmem %s3, %s159
      %p161 = scmp.lt.s32.totalorder %s14, 1
      %s162 = scalar_select %p161, %s14, 1
      %s163 = smul.addr %s162, 24
      %s164 = smul.addr %s163, 8
      %s165 = scalar_lea.vmem %s0, %s164
      %p166 = scmp.lt.s32.totalorder %s14, 1
      %s167 = scalar_select %p166, %s14, 1
      %s168 = smul.addr %s167, 24
      %s169 = smul.addr %s168, 8
      %s170 = scalar_lea.vmem %s3, %s169
      %v171 = vld [vmem:[%s165] sm:$0xff]
      %v172 = vld [vmem:[%s165 + $0x8] sm:$0xff]
      %v173 = vld [vmem:[%s165 + $0x10] sm:$0xff]
      %v174 = vld [vmem:[%s165 + $0x18] sm:$0xff]
      %v175 = vld [vmem:[%s165 + $0x20] sm:$0xf]
      %v176 = vld [vmem:[%s165 + $0x28] sm:$0xf]
      %s177 = scalar_lea.vmem %s165, 48
      %v178 = vld [vmem:[%s177] sm:$0xff]
      %v179 = vld [vmem:[%s177 + $0x8] sm:$0xff]
      %v180 = vld [vmem:[%s177 + $0x10] sm:$0xff]
      %v181 = vld [vmem:[%s177 + $0x18] sm:$0xff]
      %v182 = vld [vmem:[%s177 + $0x20] sm:$0xf]
      %v183 = vld [vmem:[%s177 + $0x28] sm:$0xf]
      %v184 = vadd.f32 %v171, %v178
      %v185 = vadd.f32 %v172, %v179
      %v186 = vadd.f32 %v173, %v180
      %v187 = vadd.f32 %v174, %v181
      %v188 = vadd.f32 %v175, %v182
      %v189 = vadd.f32 %v176, %v183
      %v190 = vmax.f32 %v171, %v178
      %v191 = vmax.f32 %v172, %v179
      %v192 = vmax.f32 %v173, %v180
      %v193 = vmax.f32 %v174, %v181
      %v194 = vmax.f32 %v175, %v182
      %v195 = vmax.f32 %v176, %v183
      %s196 = scalar_lea.vmem %s165, 96
      %v197 = vld [vmem:[%s196] sm:$0xff]
      %v198 = vld [vmem:[%s196 + $0x8] sm:$0xff]
      %v199 = vld [vmem:[%s196 + $0x10] sm:$0xff]
      %v200 = vld [vmem:[%s196 + $0x18] sm:$0xff]
      %v201 = vld [vmem:[%s196 + $0x20] sm:$0xf]
      %v202 = vld [vmem:[%s196 + $0x28] sm:$0xf]
      %v203 = vadd.f32 %v184, %v197
      %v204 = vadd.f32 %v185, %v198
      %v205 = vadd.f32 %v186, %v199
      %v206 = vadd.f32 %v187, %v200
      %v207 = vadd.f32 %v188, %v201
      %v208 = vadd.f32 %v189, %v202
      %v209 = vmax.f32 %v190, %v197
      %v210 = vmax.f32 %v191, %v198
      %v211 = vmax.f32 %v192, %v199
      %v212 = vmax.f32 %v193, %v200
      %v213 = vmax.f32 %v194, %v201
      %v214 = vmax.f32 %v195, %v202
      %s215 = scalar_lea.vmem %s165, 144
      %v216 = vld [vmem:[%s215] sm:$0xff]
      %v217 = vld [vmem:[%s215 + $0x8] sm:$0xff]
      %v218 = vld [vmem:[%s215 + $0x10] sm:$0xff]
      %v219 = vld [vmem:[%s215 + $0x18] sm:$0xff]
      %v220 = vld [vmem:[%s215 + $0x20] sm:$0xf]
      %v221 = vld [vmem:[%s215 + $0x28] sm:$0xf]
      %v222 = vadd.f32 %v203, %v216
      %v223 = vadd.f32 %v204, %v217
      %v224 = vadd.f32 %v205, %v218
      %v225 = vadd.f32 %v206, %v219
      %v226 = vadd.f32 %v207, %v220
      %v227 = vadd.f32 %v208, %v221
      %v228 = vmax.f32 %v209, %v216
      %v229 = vmax.f32 %v210, %v217
      %v230 = vmax.f32 %v211, %v218
      %v231 = vmax.f32 %v212, %v219
      %v232 = vmax.f32 %v213, %v220
      %v233 = vmax.f32 %v214, %v221
      %v234 = vadd.f32 %v222, %v223
      %235 = vadd.xlane.f32.xlu0 %v234
      %v236 = vpop.xlane.xlu0 %235
      %v237 = vadd.f32 %v224, %v225
      %238 = vadd.xlane.f32.xlu0 %v237
      %v239 = vpop.xlane.xlu0 %238
      %vm240 = vcmask 1043456
      %v241 = vsel %vm240, %v226, 0.0
      %v242 = vsel %vm240, %v227, 0.0
      %v243 = vadd.f32 %v241, %v242
      %244 = vadd.xlane.f32.xlu0 %v243
      %v245 = vpop.xlane.xlu0 %244
      %v246 = vmul.f32 %v236, 0.0009765625
      %v247 = vmul.f32 %v239, 0.0009765625
      %v248 = vmul.f32 %v245, 0.0009765625
      %v249 = vmax.f32 %v228, %v229
      %250 = vmax.xlane.f32.xlu0 %v249
      %v251 = vpop.xlane.xlu0 %250
      %v252 = vmax.f32 %v230, %v231
      %253 = vmax.xlane.f32.xlu0 %v252
      %v254 = vpop.xlane.xlu0 %253
      %v255 = vsel %vm240, %v232, -inf
      %v256 = vsel %vm240, %v233, -inf
      %v257 = vmax.f32 %v255, %v256
      %258 = vmax.xlane.f32.xlu0 %v257
      %v259 = vpop.xlane.xlu0 %258
      %vm260 = vcmask 7168
      %v261 = vsel %vm260, %v246, %v251
      %v262 = vsel %vm260, %v247, %v254
      %v263 = vsel %vm260, %v248, %v259
      %v264 = vld [vmem:[%s1] sm:$0xf]
      %v265 = vld [vmem:[%s2] sm:$0xff]
      %v266 = vld [vmem:[%s2 + $0x8] sm:$0xff]
      %v267 = vld [vmem:[%s2 + $0x10] sm:$0xf]
      %vm268 = vcmask 162816
      %v270 = vsel %vm268, %v264, 0
      %v273 = vsel %vm240, %v263, 0
      %275 = vmatpush.msra.mxu0 0.0
      %276 = vmatpush.msra.mxu0 0.0
      %277 = vmatpush.msra.mxu0 0.0
      %278 = vmatpush.msra.mxu0 0.0
      %279 = vmatpush.msra.mxu0 0.0
      %280 = vmatpush.msra.mxu0 0.0
      %281 = vmatpush.msra.mxu0 0.0
      %282 = vmatpush.msra.mxu0 0.0
      %283 = vmatpush.msra.mxu0 0.0
      %284 = vmatpush.msra.mxu0 0.0
      %285 = vmatpush.msra.mxu0 0.0
      %286 = vmatpush.msra.mxu0 0.0
      %287 = vmatpush.msra.mxu0 0.0
      %288 = vmatpush.msra.mxu0 %v273
      %289 = vmatpush.msra.mxu0 %v262
      %290 = vmatpush.msra.mxu0 %v261
      %291 = vmatmul.f32.gmra.mxu0 %v270
      %v292 = vpop.f32.mrf.mxu0
      %v293 = vadd.f32 0.0, %v292
      %294 = vdwg.mxu0
      %v295 = vmax.f32 %v293, 0.0
      %vm296 = vcmask 31744
      %v298 = vsel %vm296, %v265, 0
      %v301 = vsel %vm296, %v266, 0
      %v304 = vsel %vm296, %v267, 0
      %v307 = vsel %vm240, %v295, 0
      %309 = vmatpush.msra.mxu0 0.0
      %310 = vmatpush.msra.mxu0 0.0
      %311 = vmatpush.msra.mxu0 0.0
      %312 = vmatpush.msra.mxu0 0.0
      %313 = vmatpush.msra.mxu0 0.0
      %314 = vmatpush.msra.mxu0 0.0
      %315 = vmatpush.msra.mxu0 0.0
      %316 = vmatpush.msra.mxu0 0.0
      %317 = vmatpush.msra.mxu0 0.0
      %318 = vmatpush.msra.mxu0 0.0
      %319 = vmatpush.msra.mxu0 0.0
      %320 = vmatpush.msra.mxu0 0.0
      %321 = vmatpush.msra.mxu0 0.0
      %322 = vmatpush.msra.mxu0 0.0
      %323 = vmatpush.msra.mxu0 0.0
      %324 = vmatpush.msra.mxu0 %v307
      %325 = vmatmul.f32.gmra.mxu0 %v298
      %v326 = vpop.f32.mrf.mxu0
      %v327 = vadd.f32 0.0, %v326
      %328 = vmatmul.f32.gmra.mxu0 %v301
      %v329 = vpop.f32.mrf.mxu0
      %v330 = vadd.f32 0.0, %v329
      %331 = vmatmul.f32.gmra.mxu0 %v304
      %v332 = vpop.f32.mrf.mxu0
      %v333 = vadd.f32 0.0, %v332
      %334 = vdwg.mxu0
      %338 = vrot.lane.b32.xlu0 %v327, 127
      %v339 = vpop.permute.xlu0 %338
      %340 = vrot.lane.b32.xlu0 %v330, 127
      %v341 = vpop.permute.xlu0 %340
      %342 = vrot.lane.b32.xlu0 %v333, 127
      %v343 = vpop.permute.xlu0 %342
      %v347 = vadd.f32 %v327, %v339
      %v348 = vadd.f32 %v330, %v341
      %v349 = vadd.f32 %v333, %v343
      %v350 = vxor.u32 %v347, 2147483648
      %v351 = vxor.u32 %v348, 2147483648
      %v352 = vxor.u32 %v349, 2147483648
      %v353 = vmul.f32 %v350, 1.442695
      %v354 = vpow.pop %v353
      %v355 = vmul.f32 %v351, 1.442695
      %v356 = vpow.pop %v355
      %v357 = vmul.f32 %v352, 1.442695
      %v358 = vpow.pop %v357
      %v359 = vadd.f32 %v354, 1.0
      %v360 = vadd.f32 %v356, 1.0
      %v361 = vadd.f32 %v358, 1.0
      %v362 = vrcp.pop %v359
      %v363 = vmul.f32 %v359, %v362
      %v364 = vsub.f32 1.0, %v363
      %v365 = vmul.f32 %v362, %v364
      %v366 = vadd.f32 %v362, %v365
      %vm367 = vweird.f32 %v359
      %vm368 = vweird.f32 %v362
      %vm369 = vmor %vm367, %vm368
      %v370 = vsel %vm369, %v362, %v366
      %v371 = vand.u32 2147483647, %v359
      %vm372 = vcmp.eq.f32.partialorder %v371, 8.507059e+37
      %v373 = vand.u32 %v359, 2147483648
      %v374 = vor.u32 1.1754944e-38, %v373
      %v375 = vsel %vm372, %v374, %v370
      %v376 = vmul.f32 1.0, %v375
      %v377 = vrcp.pop %v360
      %v378 = vmul.f32 %v360, %v377
      %v379 = vsub.f32 1.0, %v378
      %v380 = vmul.f32 %v377, %v379
      %v381 = vadd.f32 %v377, %v380
      %vm382 = vweird.f32 %v360
      %vm383 = vweird.f32 %v377
      %vm384 = vmor %vm382, %vm383
      %v385 = vsel %vm384, %v377, %v381
      %v386 = vand.u32 2147483647, %v360
      %vm387 = vcmp.eq.f32.partialorder %v386, 8.507059e+37
      %v388 = vand.u32 %v360, 2147483648
      %v389 = vor.u32 1.1754944e-38, %v388
      %v390 = vsel %vm387, %v389, %v385
      %v391 = vmul.f32 1.0, %v390
      %v392 = vrcp.pop %v361
      %v393 = vmul.f32 %v361, %v392
      %v394 = vsub.f32 1.0, %v393
      %v395 = vmul.f32 %v392, %v394
      %v396 = vadd.f32 %v392, %v395
      %vm397 = vweird.f32 %v361
      %vm398 = vweird.f32 %v392
      %vm399 = vmor %vm397, %vm398
      %v400 = vsel %vm399, %v392, %v396
      %v401 = vand.u32 2147483647, %v361
      %vm402 = vcmp.eq.f32.partialorder %v401, 8.507059e+37
      %v403 = vand.u32 %v361, 2147483648
      %v404 = vor.u32 1.1754944e-38, %v403
      %v405 = vsel %vm402, %v404, %v400
      %v406 = vmul.f32 1.0, %v405
      %408 = vset.pattern.permute.xlu0 0
      %409 = vperm.xlu0 %408, %v376
      %v410 = vpop.permute.xlu0 %409
      %413 = vset.pattern.permute.xlu0 0
      %414 = vperm.xlu0 %413, %v391
      %v415 = vpop.permute.xlu0 %414
      %418 = vset.pattern.permute.xlu0 0
      %419 = vperm.xlu0 %418, %v406
      %v420 = vpop.permute.xlu0 %419
      %v422 = vmul.f32 %v171, %v410
      %v423 = vmul.f32 %v172, %v410
      %v424 = vmul.f32 %v173, %v415
      %v425 = vmul.f32 %v174, %v415
      %v426 = vmul.f32 %v175, %v420
      %v427 = vmul.f32 %v176, %v420
      %v428 = vmax.f32 %v422, 0.0
      %v429 = vmax.f32 %v423, 0.0
      %v430 = vmax.f32 %v424, 0.0
      %v431 = vmax.f32 %v425, 0.0
      %v432 = vmax.f32 %v426, 0.0
      %v433 = vmax.f32 %v427, 0.0
      %434 = vst [vmem:[%s170] sm:$0xff] %v428
      %435 = vst [vmem:[%s170 + $0x8] sm:$0xff] %v429
      %436 = vst [vmem:[%s170 + $0x10] sm:$0xff] %v430
      %437 = vst [vmem:[%s170 + $0x18] sm:$0xff] %v431
      %438 = vst [vmem:[%s170 + $0x20] sm:$0xf] %v432
      %439 = vst [vmem:[%s170 + $0x28] sm:$0xf] %v433
      %v440 = vld [vmem:[%s177] sm:$0xff]
      %v441 = vld [vmem:[%s177 + $0x8] sm:$0xff]
      %v442 = vld [vmem:[%s177 + $0x10] sm:$0xff]
      %v443 = vld [vmem:[%s177 + $0x18] sm:$0xff]
      %v444 = vld [vmem:[%s177 + $0x20] sm:$0xf]
      %v445 = vld [vmem:[%s177 + $0x28] sm:$0xf]
      %v446 = vmul.f32 %v440, %v410
      %v447 = vmul.f32 %v441, %v410
      %v448 = vmul.f32 %v442, %v415
      %v449 = vmul.f32 %v443, %v415
      %v450 = vmul.f32 %v444, %v420
      %v451 = vmul.f32 %v445, %v420
      %v452 = vmax.f32 %v446, 0.0
      %v453 = vmax.f32 %v447, 0.0
      %v454 = vmax.f32 %v448, 0.0
      %v455 = vmax.f32 %v449, 0.0
      %v456 = vmax.f32 %v450, 0.0
      %v457 = vmax.f32 %v451, 0.0
      %s458 = scalar_lea.vmem %s170, 48
      %459 = vst [vmem:[%s458] sm:$0xff] %v452
      %460 = vst [vmem:[%s458 + $0x8] sm:$0xff] %v453
      %461 = vst [vmem:[%s458 + $0x10] sm:$0xff] %v454
      %462 = vst [vmem:[%s458 + $0x18] sm:$0xff] %v455
      %463 = vst [vmem:[%s458 + $0x20] sm:$0xf] %v456
      %464 = vst [vmem:[%s458 + $0x28] sm:$0xf] %v457
      %v465 = vld [vmem:[%s196] sm:$0xff]
      %v466 = vld [vmem:[%s196 + $0x8] sm:$0xff]
      %v467 = vld [vmem:[%s196 + $0x10] sm:$0xff]
      %v468 = vld [vmem:[%s196 + $0x18] sm:$0xff]
      %v469 = vld [vmem:[%s196 + $0x20] sm:$0xf]
      %v470 = vld [vmem:[%s196 + $0x28] sm:$0xf]
      %v471 = vmul.f32 %v465, %v410
      %v472 = vmul.f32 %v466, %v410
      %v473 = vmul.f32 %v467, %v415
      %v474 = vmul.f32 %v468, %v415
      %v475 = vmul.f32 %v469, %v420
      %v476 = vmul.f32 %v470, %v420
      %v477 = vmax.f32 %v471, 0.0
      %v478 = vmax.f32 %v472, 0.0
      %v479 = vmax.f32 %v473, 0.0
      %v480 = vmax.f32 %v474, 0.0
      %v481 = vmax.f32 %v475, 0.0
      %v482 = vmax.f32 %v476, 0.0
      %s483 = scalar_lea.vmem %s170, 96
      %484 = vst [vmem:[%s483] sm:$0xff] %v477
      %485 = vst [vmem:[%s483 + $0x8] sm:$0xff] %v478
      %486 = vst [vmem:[%s483 + $0x10] sm:$0xff] %v479
      %487 = vst [vmem:[%s483 + $0x18] sm:$0xff] %v480
      %488 = vst [vmem:[%s483 + $0x20] sm:$0xf] %v481
      %489 = vst [vmem:[%s483 + $0x28] sm:$0xf] %v482
      %v490 = vld [vmem:[%s215] sm:$0xff]
      %v491 = vld [vmem:[%s215 + $0x8] sm:$0xff]
      %v492 = vld [vmem:[%s215 + $0x10] sm:$0xff]
      %v493 = vld [vmem:[%s215 + $0x18] sm:$0xff]
      %v494 = vld [vmem:[%s215 + $0x20] sm:$0xf]
      %v495 = vld [vmem:[%s215 + $0x28] sm:$0xf]
      %v496 = vmul.f32 %v490, %v410
      %v497 = vmul.f32 %v491, %v410
      %v498 = vmul.f32 %v492, %v415
      %v499 = vmul.f32 %v493, %v415
      %v500 = vmul.f32 %v494, %v420
      %v501 = vmul.f32 %v495, %v420
      %v502 = vmax.f32 %v496, 0.0
      %v503 = vmax.f32 %v497, 0.0
      %v504 = vmax.f32 %v498, 0.0
      %v505 = vmax.f32 %v499, 0.0
      %v506 = vmax.f32 %v500, 0.0
      %v507 = vmax.f32 %v501, 0.0
      %s508 = scalar_lea.vmem %s170, 144
      %509 = vst [vmem:[%s508] sm:$0xff] %v502
      %510 = vst [vmem:[%s508 + $0x8] sm:$0xff] %v503
      %511 = vst [vmem:[%s508 + $0x10] sm:$0xff] %v504
      %512 = vst [vmem:[%s508 + $0x18] sm:$0xff] %v505
      %513 = vst [vmem:[%s508 + $0x20] sm:$0xf] %v506
      %514 = vst [vmem:[%s508 + $0x28] sm:$0xf] %v507
      %p515 = scmp.lt.s32.totalorder %s14, 1
      %s516 = scalar_select %p515, %s14, 1
      %s517 = smul.addr %s516, 24
      %s518 = smul.addr %s517, 8
      %s519 = scalar_lea.vmem %s3, %s518
      // Predicated region
      $region33: #{tpu_custom_call.1} parent=31 // pred_check
        %p520 = pneg %p100
      $region34: #{tpu_custom_call.1} parent=31 // pred_check_branch
        %522 = sbr.rel (%p520) target = $region36
      $region35: #{tpu_custom_call.1} parent=31 // pred_region
        _
      $region36: #{tpu_custom_call.1} parent=31 // pred_fallthru
        _
    $region32: #{tpu_custom_call.1} parent=5 // pred_fallthru
      _
    %p523 = scmp.le.s32.totalorder 2, %s9
    // Predicated region
    $region37: #{tpu_custom_call.1} parent=5 // pred_check
      %p524 = pneg %p523
    $region38: #{tpu_custom_call.1} parent=5 // pred_check_branch
      %526 = sbr.rel (%p524) target = $region40
    $region39: #{tpu_custom_call.1} parent=5 // pred_region
      %s527 = ssub.s32 %s9, 2
      // Predicated region
      $region41: #{tpu_custom_call.1} parent=39 // pred_check
        %p528 = pneg %p106
      $region42: #{tpu_custom_call.1} parent=39 // pred_check_branch
        %530 = sbr.rel (%p528) target = $region44
      $region43: #{tpu_custom_call.1} parent=39 // pred_region
        %p531 = scmp.lt.s32.totalorder %s15, 1
        %s532 = scalar_select %p531, %s15, 1
        %s533 = smul.addr %s532, 24
        %s534 = smul.addr %s533, 8
        %s535 = scalar_lea.vmem %s3, %s534
      $region44: #{tpu_custom_call.1} parent=39 // pred_fallthru
        _
    $region40: #{tpu_custom_call.1} parent=5 // pred_fallthru
      _
  $region6: #{tpu_custom_call.1} parent=0 // loop_footer
    %s13 = sadd.s32 1, %s9
  $region7: #{tpu_custom_call.1} parent=0 // loop_footer_branch
    %8 = sbr.rel target = $region3
  $region8: #{tpu_custom_call.1} parent=0 // loop_exit
    _

</llo_original>
